<compile_context>
chip_gen: v5e
topology: v5e:2x2
jax: 0.10.0
libtpu: 0.0.40
codegen_flags: <defaults>
</compile_context>

<pallas_src>
import math

import jax
import jax.numpy as jnp
from jax.experimental import pallas as pl
from jax.experimental.pallas import tpu as pltpu

# ----------------------------- bert-tiny config --------------------------------
HIDDEN = 128
HEADS = 2
HEAD_DIM = HIDDEN // HEADS      # 64
INTER = 512
LAYERS = 2
VOCAB = 30522
MAX_POS = 512
TYPE_VOCAB = 2
LN_EPS = 1e-12
FC_DIM = 64


def _layernorm(x, gamma, beta, eps=LN_EPS):
    mu = jnp.mean(x, axis=-1, keepdims=True)
    var = jnp.mean(jnp.square(x - mu), axis=-1, keepdims=True)
    return (x - mu) * jax.lax.rsqrt(var + eps) * gamma + beta


def _gelu(x):
    return jax.nn.gelu(x, approximate=True)


# -------------------------- embeddings LayerNorm kernel ------------------------
def _emb_ln_kernel(x_ref, g_ref, b_ref, o_ref):
    o_ref[...] = _layernorm(x_ref[...], g_ref[...], b_ref[...]).astype(o_ref.dtype)


def embeddings(x_ids, params):
    B, S = x_ids.shape
    pos_ids = jnp.arange(S)
    emb = (jnp.take(params["word_emb"], x_ids, axis=0)
           + params["pos_emb"][pos_ids][None, :, :]
           + params["type_emb"][0][None, None, :])          # token_type_ids == 0
    emb2 = emb.reshape(B * S, HIDDEN).astype(jnp.float32)
    out = pl.pallas_call(
        _emb_ln_kernel,
        out_shape=jax.ShapeDtypeStruct((B * S, HIDDEN), jnp.float32),
        in_specs=[
            pl.BlockSpec((B * S, HIDDEN), lambda: (0, 0)),
            pl.BlockSpec((1, HIDDEN), lambda: (0, 0)),
            pl.BlockSpec((1, HIDDEN), lambda: (0, 0)),
        ],
        out_specs=pl.BlockSpec((B * S, HIDDEN), lambda: (0, 0)),
    )(emb2, params["emb_ln_g"], params["emb_ln_b"])
    return out.reshape(B, S, HIDDEN)


# ------------------------- fused transformer-layer kernel ----------------------
def _encoder_layer_kernel(x_ref, mask_ref, wqkv_ref, bqkv_ref, wo_ref, bo_ref,
                          ln1g_ref, ln1b_ref, w1_ref, b1_ref, w2_ref, b2_ref,
                          ln2g_ref, ln2b_ref, o_ref):
    x = x_ref[0]                                   # (S, H)
    mask = mask_ref[0]                             # (1, S) additive mask

    # fused QKV projection: one (S,H) x (H,3H) GEMM, weights already (in,out)
    qkv = (jnp.dot(x, wqkv_ref[...], preferred_element_type=jnp.float32)
           + bqkv_ref[...])                        # (S, 3H)
    scale = 1.0 / math.sqrt(HEAD_DIM)
    q = qkv[:, 0 * HIDDEN:1 * HIDDEN] * scale
    k = qkv[:, 1 * HIDDEN:2 * HIDDEN]
    v = qkv[:, 2 * HIDDEN:3 * HIDDEN]

    ctx = []
    for h in range(HEADS):                         # static unrolled, HEADS == 2
        sl = slice(h * HEAD_DIM, (h + 1) * HEAD_DIM)
        qh, kh, vh = q[:, sl], k[:, sl], v[:, sl]
        # q @ k^T via contracting-dim dot_general (no in-kernel transpose)
        scores = jax.lax.dot_general(
            qh, kh, (((1,), (1,)), ((), ())),
            preferred_element_type=jnp.float32) + mask       # (S, S)
        m = jnp.max(scores, axis=-1, keepdims=True)
        p = jnp.exp(scores - m)
        p = p / jnp.sum(p, axis=-1, keepdims=True)
        ctx.append(jnp.dot(p, vh, preferred_element_type=jnp.float32))
    context = jnp.concatenate(ctx, axis=-1)        # (S, H)

    attn = (jnp.dot(context, wo_ref[...], preferred_element_type=jnp.float32)
            + bo_ref[...])
    h1 = _layernorm(attn + x, ln1g_ref[...], ln1b_ref[...])

    inter = _gelu(jnp.dot(h1, w1_ref[...], preferred_element_type=jnp.float32)
                  + b1_ref[...])                   # (S, INTER)
    ffn = (jnp.dot(inter, w2_ref[...], preferred_element_type=jnp.float32)
           + b2_ref[...])
    o_ref[0] = _layernorm(ffn + h1, ln2g_ref[...], ln2b_ref[...]).astype(o_ref.dtype)


def encoder_layer(x, mask_add, lp):
    B, S, H = x.shape
    return pl.pallas_call(
        _encoder_layer_kernel,
        out_shape=jax.ShapeDtypeStruct((B, S, H), jnp.float32),
        grid_spec=pltpu.PrefetchScalarGridSpec(
            num_scalar_prefetch=0,
            grid=(B,),
            in_specs=[
                pl.BlockSpec((1, S, H), lambda b: (b, 0, 0)),
                pl.BlockSpec((1, 1, S), lambda b: (b, 0, 0)),
                pl.BlockSpec((H, 3 * H), lambda b: (0, 0)),
                pl.BlockSpec((1, 3 * H), lambda b: (0, 0)),
                pl.BlockSpec((H, H), lambda b: (0, 0)),
                pl.BlockSpec((1, H), lambda b: (0, 0)),
                pl.BlockSpec((1, H), lambda b: (0, 0)),
                pl.BlockSpec((1, H), lambda b: (0, 0)),
                pl.BlockSpec((H, INTER), lambda b: (0, 0)),
                pl.BlockSpec((1, INTER), lambda b: (0, 0)),
                pl.BlockSpec((INTER, H), lambda b: (0, 0)),
                pl.BlockSpec((1, H), lambda b: (0, 0)),
                pl.BlockSpec((1, H), lambda b: (0, 0)),
                pl.BlockSpec((1, H), lambda b: (0, 0)),
            ],
            out_specs=pl.BlockSpec((1, S, H), lambda b: (b, 0, 0)),
        ),
        compiler_params=pltpu.CompilerParams(
            dimension_semantics=("parallel",)),      # batch axis: megacore-shardable
    )(x, mask_add, lp["wqkv"], lp["bqkv"], lp["wo"], lp["bo"],
      lp["ln1_g"], lp["ln1_b"], lp["w1"], lp["b1"], lp["w2"], lp["b2"],
      lp["ln2_g"], lp["ln2_b"])


# ------------------------------ classifier head --------------------------------
def _head_kernel(x_ref, wfc_ref, bfc_ref, wfc1_ref, bfc1_ref, o_ref):
    # F.dropout (eval) -> identity; fused fc -> fc1 into one kernel.
    h = (jnp.dot(x_ref[...], wfc_ref[...], preferred_element_type=jnp.float32)
         + bfc_ref[...])
    o_ref[...] = (jnp.dot(h, wfc1_ref[...], preferred_element_type=jnp.float32)
                  + bfc1_ref[...])


def classifier_head(cls, wfc, bfc, wfc1, bfc1, out_dim):
    B, H = cls.shape
    o_pad = 128                                    # lane-dense padded output slab
    wfc1_p = jnp.zeros((FC_DIM, o_pad), jnp.float32).at[:, :out_dim].set(wfc1)
    bfc1_p = jnp.zeros((1, o_pad), jnp.float32).at[:, :out_dim].set(bfc1)
    out = pl.pallas_call(
        _head_kernel,
        out_shape=jax.ShapeDtypeStruct((B, o_pad), jnp.float32),
        in_specs=[
            pl.BlockSpec((B, H), lambda: (0, 0)),
            pl.BlockSpec((H, FC_DIM), lambda: (0, 0)),
            pl.BlockSpec((1, FC_DIM), lambda: (0, 0)),
            pl.BlockSpec((FC_DIM, o_pad), lambda: (0, 0)),
            pl.BlockSpec((1, o_pad), lambda: (0, 0)),
        ],
        out_specs=pl.BlockSpec((B, o_pad), lambda: (0, 0)),
    )(cls, wfc, bfc.reshape(1, FC_DIM), wfc1_p, bfc1_p)
    return out[:, :out_dim]


# -------------------------------- full forward ---------------------------------
def bert_model_ft_forward(x_ids, x_mask, params, out_dim):
    B, S = x_ids.shape
    h = embeddings(x_ids, params)
    mask_add = ((1.0 - x_mask.astype(jnp.float32)) * -1e9).reshape(B, 1, S)
    for lp in params["layers"]:
        h = encoder_layer(h, mask_add, lp)
    cls = h[:, 0, :]                               # bert_output[0][:, 0, :]
    return classifier_head(cls, params["fc_w"], params["fc_b"],
                           params["fc1_w"], params["fc1_b"], out_dim)


# ----------------------------- pure-JAX reference ------------------------------
def bert_model_ft_reference(x_ids, x_mask, params, out_dim):
    B, S = x_ids.shape
    pos_ids = jnp.arange(S)
    emb = (jnp.take(params["word_emb"], x_ids, axis=0)
           + params["pos_emb"][pos_ids][None, :, :]
           + params["type_emb"][0][None, None, :])
    h = _layernorm(emb, params["emb_ln_g"], params["emb_ln_b"])
    mask_add = ((1.0 - x_mask.astype(jnp.float32)) * -1e9)[:, None, None, :]
    for lp in params["layers"]:
        qkv = h @ lp["wqkv"] + lp["bqkv"]
        q, k, v = jnp.split(qkv, 3, axis=-1)

        def heads(t):
            return t.reshape(B, S, HEADS, HEAD_DIM).transpose(0, 2, 1, 3)

        qh, kh, vh = heads(q), heads(k), heads(v)
        scores = (jnp.einsum("bhqd,bhkd->bhqk", qh, kh) / math.sqrt(HEAD_DIM)
                  + mask_add)
        probs = jax.nn.softmax(scores, axis=-1)
        ctx = jnp.einsum("bhqk,bhkd->bhqd", probs, vh)
        ctx = ctx.transpose(0, 2, 1, 3).reshape(B, S, HIDDEN)
        attn = ctx @ lp["wo"] + lp["bo"]
        h1 = _layernorm(attn + h, lp["ln1_g"], lp["ln1_b"])
        inter = _gelu(h1 @ lp["w1"] + lp["b1"])
        ffn = inter @ lp["w2"] + lp["b2"]
        h = _layernorm(ffn + h1, lp["ln2_g"], lp["ln2_b"])
    cls = h[:, 0, :]
    return (cls @ params["fc_w"] + params["fc_b"]) @ params["fc1_w"] + params["fc1_b"]


# ----------------------------------- params ------------------------------------
def init_params(key, out_dim):
    keys = jax.random.split(key, 40)
    it = iter(keys)

    def n(shape, std=0.02):
        return std * jax.random.normal(next(it), shape, jnp.float32)

    def layer():
        return dict(
            wqkv=n((HIDDEN, 3 * HIDDEN)), bqkv=n((1, 3 * HIDDEN)),
            wo=n((HIDDEN, HIDDEN)), bo=n((1, HIDDEN)),
            ln1_g=1.0 + n((1, HIDDEN)), ln1_b=n((1, HIDDEN)),
            w1=n((HIDDEN, INTER)), b1=n((1, INTER)),
            w2=n((INTER, HIDDEN)), b2=n((1, HIDDEN)),
            ln2_g=1.0 + n((1, HIDDEN)), ln2_b=n((1, HIDDEN)),
        )

    return dict(
        word_emb=n((VOCAB, HIDDEN)),
        pos_emb=n((MAX_POS, HIDDEN)),
        type_emb=n((TYPE_VOCAB, HIDDEN)),
        emb_ln_g=1.0 + n((1, HIDDEN)),
        emb_ln_b=n((1, HIDDEN)),
        layers=[layer() for _ in range(LAYERS)],
        fc_w=n((HIDDEN, FC_DIM)), fc_b=n((FC_DIM,)),
        fc1_w=n((FC_DIM, out_dim)), fc1_b=n((out_dim,)),
    )


if __name__ == "__main__":
    B, S, OUT = 2, 8, 4
    key = jax.random.PRNGKey(0)
    kp, kid = jax.random.split(key)
    params = init_params(kp, OUT)
    x_ids = jax.random.randint(kid, (B, S), 0, VOCAB, dtype=jnp.int32)
    x_mask = jnp.array([[1, 1, 1, 1, 1, 1, 1, 1],
                        [1, 1, 1, 1, 1, 1, 0, 0]], jnp.int32)

    out = jax.block_until_ready(bert_model_ft_forward(x_ids, x_mask, params, OUT))
    ref = jax.block_until_ready(bert_model_ft_reference(x_ids, x_mask, params, OUT))

    assert out.shape == (B, OUT), out.shape
    err = float(jnp.max(jnp.abs(out - ref)))
    assert err < 1e-3, err
    print("KERNEL_OK")
</pallas_src>

<mosaic_0001>
module attributes {stable_mosaic.version = 11 : i64} {
  func.func @_emb_ln_kernel(%arg0: memref<16x128xf32, #tpu.memory_space<vmem>>, %arg1: memref<1x128xf32, #tpu.memory_space<vmem>>, %arg2: memref<1x128xf32, #tpu.memory_space<vmem>>, %arg3: memref<16x128xf32, #tpu.memory_space<vmem>>) attributes {dimension_semantics = [], scalar_prefetch = 0 : i64, scratch_operands = 0 : i64, tpu.core_type = #tpu.core_type<tc>} {
    %c0 = arith.constant 0 : index
    %c0_0 = arith.constant 0 : index
    %0 = vector.load %arg0[%c0, %c0_0] : memref<16x128xf32, #tpu.memory_space<vmem>>, vector<16x128xf32>
    %c0_1 = arith.constant 0 : index
    %c0_2 = arith.constant 0 : index
    %1 = vector.load %arg1[%c0_1, %c0_2] : memref<1x128xf32, #tpu.memory_space<vmem>>, vector<1x128xf32>
    %c0_3 = arith.constant 0 : index
    %c0_4 = arith.constant 0 : index
    %2 = vector.load %arg2[%c0_3, %c0_4] : memref<1x128xf32, #tpu.memory_space<vmem>>, vector<1x128xf32>
    %cst = arith.constant dense<0.000000e+00> : vector<16xf32>
    %3 = vector.multi_reduction <add>, %0, %cst [1] : vector<16x128xf32> to vector<16xf32>
    %4 = vector.shape_cast %3 : vector<16xf32> to vector<16x1xf32>
    %cst_5 = arith.constant 1.280000e+02 : f32
    %5 = vector.broadcast %cst_5 : f32 to vector<16x1xf32>
    %6 = arith.divf %4, %5 : vector<16x1xf32>
    %7 = vector.broadcast %6 : vector<16x1xf32> to vector<16x128xf32>
    %8 = arith.subf %0, %7 : vector<16x128xf32>
    %9 = arith.mulf %8, %8 : vector<16x128xf32>
    %cst_6 = arith.constant dense<0.000000e+00> : vector<16xf32>
    %10 = vector.multi_reduction <add>, %9, %cst_6 [1] : vector<16x128xf32> to vector<16xf32>
    %11 = vector.shape_cast %10 : vector<16xf32> to vector<16x1xf32>
    %cst_7 = arith.constant 1.280000e+02 : f32
    %12 = vector.broadcast %cst_7 : f32 to vector<16x1xf32>
    %13 = arith.divf %11, %12 : vector<16x1xf32>
    %14 = vector.broadcast %6 : vector<16x1xf32> to vector<16x128xf32>
    %15 = arith.subf %0, %14 : vector<16x128xf32>
    %cst_8 = arith.constant 9.99999996E-13 : f32
    %16 = vector.broadcast %cst_8 : f32 to vector<16x1xf32>
    %17 = arith.addf %13, %16 : vector<16x1xf32>
    %18 = math.rsqrt %17 : vector<16x1xf32>
    %19 = vector.broadcast %18 : vector<16x1xf32> to vector<16x128xf32>
    %20 = arith.mulf %15, %19 : vector<16x128xf32>
    %21 = vector.broadcast %1 : vector<1x128xf32> to vector<16x128xf32>
    %22 = arith.mulf %20, %21 : vector<16x128xf32>
    %23 = vector.broadcast %2 : vector<1x128xf32> to vector<16x128xf32>
    %24 = arith.addf %22, %23 : vector<16x128xf32>
    %c0_9 = arith.constant 0 : index
    %c0_10 = arith.constant 0 : index
    %25 = vector.load %arg3[%c0_9, %c0_10] : memref<16x128xf32, #tpu.memory_space<vmem>>, vector<16x128xf32>
    tpu.vector_store %arg3[%c0_9, %c0_10], %24 {strides = array<i32>} : memref<16x128xf32, #tpu.memory_space<vmem>>, vector<16x128xf32>,
    return
  }
}

</mosaic_0001>

<llo_original>
// kernel: tpu_custom_call.1
$region0: #{tpu_custom_call.1}
  #allocation0 [shape = 'u32[]', space=smem, size = 0x4, offset = 0x4, fixed_abs, tag = 'smem constant byte address 0x4 - core index']
  #allocation1 [shape = 'u32[72,128]{1,0:T(1,128)}', space=vmem, size = 0x9000, scoped, tag = 'internal scratch']
  %s0 = inlined_call_operand.hbm [shape: f32[16,128], index: 0, kind: input, shape index: {}]
  %s1 = inlined_call_operand.hbm [shape: f32[1,128], index: 1, kind: input, shape index: {}]
  %s2 = inlined_call_operand.vmem [shape: f32[1,128], index: 2, kind: input, shape index: {}]
  %s3 = inlined_call_operand.hbm [shape: f32[16,128], index: 3, kind: output, shape index: {}]
  %s4 = sld [smem:[#allocation0]]
  $region30: #{tpu_custom_call.1} parent=0
    _
  %s6 = ssub.s32 1, %s4
  %s7 = scalar_select 0, %s6, %s4
  $region1: #{tpu_custom_call.1} parent=0
    #allocation2 [shape = 'u8[8192]{0}', space=vmem, size = 0x2000, scoped, tag = 'input window, operand 0, single buffered']
    #allocation3 [shape = 's32[1]{0}', space=sflag, size = 0x4, scoped, tag = 'scoped memory for tpu_custom_call.1']
    #allocation4 [shape = 's32[1]{0}', space=sflag, size = 0x4, scoped, tag = 'scoped memory for tpu_custom_call.1']
    #allocation5 [shape = 'u8[512]{0}', space=vmem, size = 0x400, scoped, tag = 'input window, operand 1, single buffered']
    #allocation6 [shape = 's32[1]{0}', space=sflag, size = 0x4, scoped, tag = 'scoped memory for tpu_custom_call.1']
    #allocation7 [shape = 'u8[8192]{0}', space=vmem, size = 0x2000, scoped, tag = 'output window, operand 0, single buffered']
    %8 = vsyncpa [#allocation3], 0
    %9 = vsyncpa [#allocation6], 0
    %10 = vsyncpa [#allocation4], 0
    // Predicated region
    $region2: #{tpu_custom_call.1} parent=1 // pred_check
      _
    $region3: #{tpu_custom_call.1} parent=1 // pred_check_branch
      %12 = sbr.rel (0) target = $region5
    $region4: #{tpu_custom_call.1} parent=1 // pred_region
      %14 = vsyncadd [#allocation3], 0
      %s15 = sshll.u32 %s0, 4
      %s16 = int_to_ptr.hbm [resolvable:$true] %s15
      %s17 = sshll.u32 [#allocation2], 4
      %s18 = int_to_ptr.vmem [resolvable:$true] %s17
      %23 = dma.hbm_to_vmem [thread:$0]  %s16, 256, %s18, [#allocation3], 128, 128, 8
    $region5: #{tpu_custom_call.1} parent=1 // pred_fallthru
      _
    // Predicated region
    $region6: #{tpu_custom_call.1} parent=1 // pred_check
      _
    $region7: #{tpu_custom_call.1} parent=1 // pred_check_branch
      %25 = sbr.rel (0) target = $region9
    $region8: #{tpu_custom_call.1} parent=1 // pred_region
      %27 = vsyncadd [#allocation6], 0
      %s29 = sshll.u32 %s1, 4
      %s30 = int_to_ptr.hbm [resolvable:$true] %s29
      %s31 = sshll.u32 [#allocation5], 4
      %s32 = int_to_ptr.vmem [resolvable:$true] %s31
      %34 = dma.hbm_to_vmem [thread:$0]  %s30, 16, %s32, [#allocation6]
    $region9: #{tpu_custom_call.1} parent=1 // pred_fallthru
      _
    // Predicated region
    $region10: #{tpu_custom_call.1} parent=1 // pred_check
      _
    $region11: #{tpu_custom_call.1} parent=1 // pred_check_branch
      %36 = sbr.rel (0) target = $region13
    $region12: #{tpu_custom_call.1} parent=1 // pred_region
      _
    $region13: #{tpu_custom_call.1} parent=1 // pred_fallthru
      _
    // Predicated region
    $region14: #{tpu_custom_call.1} parent=1 // pred_check
      _
    $region15: #{tpu_custom_call.1} parent=1 // pred_check_branch
      %38 = sbr.rel (0) target = $region17
    $region16: #{tpu_custom_call.1} parent=1 // pred_region
      %40 = dma.done [#allocation3], 256
    $region17: #{tpu_custom_call.1} parent=1 // pred_fallthru
      _
    // Predicated region
    $region18: #{tpu_custom_call.1} parent=1 // pred_check
      _
    $region19: #{tpu_custom_call.1} parent=1 // pred_check_branch
      %42 = sbr.rel (0) target = $region21
    $region20: #{tpu_custom_call.1} parent=1 // pred_region
      %44 = dma.done [#allocation6], 16
    $region21: #{tpu_custom_call.1} parent=1 // pred_fallthru
      _
    %v45 = vld [vmem:[#allocation2] sm:$0xff]
    %v46 = vld [vmem:[#allocation2 + $0x8] sm:$0xff]
    %v47 = vld [vmem:[#allocation5] sm:$0x1]
    %v48 = vld [vmem:[%s2] sm:$0x1]
    %49 = vadd.xlane.f32.xlu0 %v45
    %v50 = vpop.xlane.xlu0 %49
    %51 = vadd.xlane.f32.xlu0 %v46
    %v52 = vpop.xlane.xlu0 %51
    %v53 = vrcp.pop 128.0
    %v54 = vmul.f32 128.0, %v53
    %v55 = vsub.f32 1.0, %v54
    %v56 = vmul.f32 %v53, %v55
    %v57 = vadd.f32 %v53, %v56
    %vm58 = vweird.f32 %v53
    %v59 = vsel %vm58, %v53, %v57
    %v60 = vmul.f32 %v50, %v59
    %v61 = vmul.f32 %v52, %v59
    %v62 = vsub.f32 %v45, %v60
    %v63 = vsub.f32 %v46, %v61
    %v64 = vmul.f32 %v62, %v62
    %v65 = vmul.f32 %v63, %v63
    %66 = vadd.xlane.f32.xlu0 %v64
    %v67 = vpop.xlane.xlu0 %66
    %68 = vadd.xlane.f32.xlu0 %v65
    %v69 = vpop.xlane.xlu0 %68
    %v70 = vmul.f32 %v67, %v59
    %v71 = vmul.f32 %v69, %v59
    %v72 = vadd.f32 %v70, 1e-12
    %v73 = vadd.f32 %v71, 1e-12
    %v74 = vrsqrt.pop %v72
    %v75 = vmul.f32 %v74, %v72
    %v76 = vmul.f32 %v75, %v74
    %v77 = vmul.f32 0.5, %v76
    %v78 = vsub.f32 1.5, %v77
    %v79 = vmul.f32 %v74, %v78
    %vm80 = vweird.f32 %v72
    %vm81 = vweird.f32 %v74
    %vm82 = vmor %vm80, %vm81
    %v83 = vsel %vm82, %v74, %v79
    %v84 = vrsqrt.pop %v73
    %v85 = vmul.f32 %v84, %v73
    %v86 = vmul.f32 %v85, %v84
    %v87 = vmul.f32 0.5, %v86
    %v88 = vsub.f32 1.5, %v87
    %v89 = vmul.f32 %v84, %v88
    %vm90 = vweird.f32 %v73
    %vm91 = vweird.f32 %v84
    %vm92 = vmor %vm90, %vm91
    %v93 = vsel %vm92, %v84, %v89
    %v94 = vmul.f32 %v62, %v83
    %v95 = vmul.f32 %v63, %v93
    %v97 = vperm.slane %v47, 0
    %v99 = vmul.f32 %v94, %v97
    %v100 = vmul.f32 %v95, %v97
    %v102 = vperm.slane %v48, 0
    %v104 = vadd.f32 %v99, %v102
    %v105 = vadd.f32 %v100, %v102
    %106 = vst [vmem:[#allocation7] sm:$0xff] %v104
    %107 = vst [vmem:[#allocation7 + $0x8] sm:$0xff] %v105
    // Predicated region
    $region22: #{tpu_custom_call.1} parent=1 // pred_check
      _
    $region23: #{tpu_custom_call.1} parent=1 // pred_check_branch
      %109 = sbr.rel (0) target = $region25
    $region24: #{tpu_custom_call.1} parent=1 // pred_region
      %111 = vsyncadd [#allocation4], 0
      %s112 = sshll.u32 [#allocation7], 4
      %s113 = int_to_ptr.vmem [resolvable:$true] %s112
      %s114 = sshll.u32 %s3, 4
      %s115 = int_to_ptr.hbm [resolvable:$true] %s114
      %120 = dma.vmem_to_hbm [thread:$0]  %s113, 256, %s115, [#allocation4], 128, 128, 8
    $region25: #{tpu_custom_call.1} parent=1 // pred_fallthru
      _
    // Predicated region
    $region26: #{tpu_custom_call.1} parent=1 // pred_check
      _
    $region27: #{tpu_custom_call.1} parent=1 // pred_check_branch
      %122 = sbr.rel (0) target = $region29
    $region28: #{tpu_custom_call.1} parent=1 // pred_region
      %124 = dma.done [#allocation4], 256
    $region29: #{tpu_custom_call.1} parent=1 // pred_fallthru
      _
    %125 = vsyncpa [#allocation3], 1
    %126 = vsyncpa [#allocation6], 1
    %127 = vsyncpa [#allocation4], 1

</llo_original>
